<compile_context>
chip_gen: v5e
topology: v5e:2x2
jax: 0.10.0
libtpu: 0.0.40
codegen_flags: <defaults>
</compile_context>

<pallas_src>
import jax
import jax.numpy as jnp
from jax import lax
from jax.experimental import pallas as pl
from jax.experimental.pallas import tpu as pltpu

BN_EPS = 1e-3        # scvi FCLayers BatchNorm1d eps
VAR_EPS = 1e-4       # Encoder.var_eps
SCALE_MIN = 1e-4     # torch.clamp(raw_scale, min=0.0001)
MATMUL_DTYPE = jnp.bfloat16          # bf16 operands, f32 MXU accumulation

VMEM_TILING_BUDGET = 40 * 1024 * 1024   # tile-sizing target (fits v7x 64 MiB VMEM)
TK_FALLBACK = 4096                       # K tile when W1 cannot stay VMEM-resident


def _round_up(n, m):
    return ((n + m - 1) // m) * m


def _cdiv(a, b):
    return (a + b - 1) // b


# ----------------------------------------------------------------------------
# Kernel: acc += x_tile @ W1' (BN folded); at last K step
#         q = ReLU(acc + b1'), out = q @ W_heads + b_heads  (lane-dense slab).
# Grid = (batch tiles [parallel], K tiles [arbitrary]); f32 accumulator scratch.
# x arrives in its native dtype and is cast to the matmul dtype in-kernel.
# ----------------------------------------------------------------------------
def _encoder_kernel(x_ref, w1_ref, b1_ref, wh_ref, bh_ref, out_ref, acc_ref):
    k = pl.program_id(1)

    @pl.when(k == 0)
    def _():
        acc_ref[...] = jnp.zeros_like(acc_ref)

    acc_ref[...] += jnp.dot(x_ref[...].astype(w1_ref.dtype), w1_ref[...],
                            preferred_element_type=jnp.float32)

    @pl.when(k == pl.num_programs(1) - 1)
    def _():
        q = jnp.maximum(acc_ref[...] + b1_ref[...], 0.0)          # f32 ReLU
        out_ref[...] = (
            jnp.dot(q.astype(wh_ref.dtype), wh_ref[...],
                    preferred_element_type=jnp.float32) + bh_ref[...]
        )


# ----------------------------------------------------------------------------
# Host-side parameter preparation:
#   * fold eval-mode BatchNorm into the first Linear (exact, f32),
#   * lane-pad n_hidden to a multiple of 128 (zero cols/rows -> exact),
#   * concatenate the four head weight matrices into one lane-dense slab,
#   * cast matmul weights to bf16 (biases stay f32).
# ----------------------------------------------------------------------------
def prepare_params(params, matmul_dtype=MATMUL_DTYPE):
    n_input, n_hidden = params["w1"].shape
    n_drug = params["wdm"].shape[1]

    H = _round_up(max(n_hidden, 128), 128)            # lane-padded hidden dim
    n_heads = 2 + 2 * n_drug
    NP = _round_up(max(n_heads, 128), 128)            # lane-padded head slab

    inv_std = params["bn_gamma"] * lax.rsqrt(params["bn_var"] + BN_EPS)     # [1, nh]
    w1f = params["w1"] * inv_std                                            # [K, nh]
    b1f = (params["b1"] - params["bn_mean"]) * inv_std + params["bn_beta"]  # [1, nh]

    w1p = jnp.zeros((n_input, H), jnp.float32).at[:, :n_hidden].set(w1f)
    b1p = jnp.zeros((1, H), jnp.float32).at[:, :n_hidden].set(b1f)

    wh = jnp.zeros((H, NP), jnp.float32)
    wh = wh.at[:n_hidden, 0:1].set(params["wth"])
    wh = wh.at[:n_hidden, 1:2].set(params["wsc"])
    wh = wh.at[:n_hidden, 2:2 + n_drug].set(params["wdm"])
    wh = wh.at[:n_hidden, 2 + n_drug:2 + 2 * n_drug].set(params["wds"])
    bh = jnp.zeros((1, NP), jnp.float32)
    bh = bh.at[:, 0:1].set(params["bth"])
    bh = bh.at[:, 1:2].set(params["bsc"])
    bh = bh.at[:, 2:2 + n_drug].set(params["bdm"])
    bh = bh.at[:, 2 + n_drug:2 + 2 * n_drug].set(params["bds"])

    return dict(
        w1=w1p.astype(matmul_dtype),
        b1=b1p.astype(jnp.float32),
        wh=wh.astype(matmul_dtype),
        bh=bh.astype(jnp.float32),
    )


def encoder_forward(prep, x, key, *, n_drug, tm_max=512):
    B, K = x.shape
    w1, b1, wh, bh = prep["w1"], prep["b1"], prep["wh"], prep["bh"]
    H = w1.shape[1]
    NP = wh.shape[1]
    x_bytes = jnp.dtype(x.dtype).itemsize
    w_bytes = jnp.dtype(w1.dtype).itemsize

    # ---- K tiling: keep W1' fully VMEM-resident whenever it fits ----
    if 2 * K * H * w_bytes <= VMEM_TILING_BUDGET // 2:
        TK, K_pad = K, K                       # single K block -> W1 DMA'd once
    else:
        TK = TK_FALLBACK
        K_pad = _round_up(K, TK)

    # ---- batch tiling: largest TM within the VMEM budget, but keep >= 2 batch
    #      tiles so the "parallel" axis can shard across v7x's two TensorCores ----
    bytes_fixed = (2 * TK * H * w_bytes            # W1' blocks (double-buffered)
                   + 2 * H * NP * w_bytes          # head weights (resident)
                   + 2 * 8 * H * 4 + 2 * 8 * NP * 4)   # biases (sublane-padded)
    per_row = 2 * TK * x_bytes + 2 * NP * 4 + H * 4    # x tiles + out tiles + acc
    tm_fit = max(8, (VMEM_TILING_BUDGET - bytes_fixed) // per_row)
    tm_fit = max(8, (tm_fit // 8) * 8)
    if B < 8:
        TM = B                                    # block == full (tiny) batch dim
    else:
        TM = max(8, min(tm_fit, tm_max, _round_up(_cdiv(B, 2), 8)))

    # No wrapper cast/pad of x in the common path.  Only the (rare) K-tiled
    # fallback needs x zero-padded along K so padding can't poison the reduction.
    xin, w1p = x, w1
    if K_pad != K:
        xin = jnp.zeros((B, K_pad), x.dtype).at[:, :K].set(x)
        w1p = jnp.zeros((K_pad, H), w1.dtype).at[:K, :].set(w1)

    grid = (_cdiv(B, TM), K_pad // TK)

    est_vmem = (2 * TM * TK * x_bytes + bytes_fixed
                + 2 * TM * NP * 4 + TM * H * 4)
    vmem_limit = int(min(64 * 1024 * 1024,
                         max(32 * 1024 * 1024, est_vmem + 8 * 1024 * 1024)))

    slab = pl.pallas_call(
        _encoder_kernel,
        out_shape=jax.ShapeDtypeStruct((B, NP), jnp.float32),
        grid_spec=pltpu.PrefetchScalarGridSpec(
            num_scalar_prefetch=0,
            grid=grid,
            in_specs=[
                pl.BlockSpec((TM, TK), lambda i, k: (i, k)),    # x tile (native dtype)
                pl.BlockSpec((TK, H), lambda i, k: (k, 0)),     # W1' (resident if nk==1)
                pl.BlockSpec((1, H), lambda i, k: (0, 0)),      # b1'
                pl.BlockSpec((H, NP), lambda i, k: (0, 0)),     # W_heads (resident)
                pl.BlockSpec((1, NP), lambda i, k: (0, 0)),     # b_heads
            ],
            out_specs=pl.BlockSpec((TM, NP), lambda i, k: (i, 0)),  # lane-dense slab
            scratch_shapes=[pltpu.VMEM((TM, H), jnp.float32)],
        ),
        compiler_params=pltpu.CompilerParams(
            dimension_semantics=("parallel", "arbitrary"),
            vmem_limit_bytes=vmem_limit,
        ),
    )(xin, w1p, b1, wh, bh)

    theta = slab[:, 0:1]
    scale = jnp.maximum(jax.nn.softplus(slab[:, 1:2]), SCALE_MIN)
    drug_loc = slab[:, 2:2 + n_drug]
    drug_var = jax.nn.softplus(slab[:, 2 + n_drug:2 + 2 * n_drug]) + VAR_EPS

    # ---- reparameterized sampling (elementwise; XLA fuses this) ----
    # TODO(synk): the Beta/Gamma draw has no Pallas equivalent; kept in jax.random.
    k_beta, k_v, k_eps = jax.random.split(key, 3)

    # PowerSpherical(dim=2) rsample: marginal-t from Beta(0.5+scale, 0.5),
    # tangential sign v uniform on S^0, then Householder reflect e1 -> loc.
    beta = jax.random.beta(k_beta, 0.5 + scale, 0.5).astype(jnp.float32)
    t = 2.0 * beta - 1.0
    v = jnp.where(jax.random.bernoulli(k_v, 0.5, (B, 1)), 1.0, -1.0).astype(jnp.float32)
    y1 = jnp.sqrt(jnp.maximum(1.0 - t * t, 0.0)) * v

    cos_t = jnp.cos(theta)
    sin_t = jnp.sin(theta)
    u0 = 1.0 - cos_t
    u1 = -sin_t
    un = jnp.sqrt(u0 * u0 + u1 * u1) + 1e-12
    u0 = u0 / un
    u1 = u1 / un
    d = t * u0 + y1 * u1
    z_cycle = jnp.concatenate([t - 2.0 * d * u0, y1 - 2.0 * d * u1], axis=1)

    # Normal rsample: loc + sqrt(var) * eps
    eps = jax.random.normal(k_eps, (B, n_drug), dtype=jnp.float32)
    z_drug = drug_loc + jnp.sqrt(drug_var) * eps

    return z_cycle, z_drug


def init_params(key, n_input, n_hidden, n_drug):
    keys = jax.random.split(key, 5)

    def lin(k, fan_in, fan_out):
        bound = 1.0 / float(fan_in) ** 0.5
        kw, kb = jax.random.split(k)
        w = jax.random.uniform(kw, (fan_in, fan_out), jnp.float32, -bound, bound)
        b = jax.random.uniform(kb, (1, fan_out), jnp.float32, -bound, bound)
        return w, b

    w1, b1 = lin(keys[0], n_input, n_hidden)
    wth, bth = lin(keys[1], n_hidden, 1)
    wsc, bsc = lin(keys[2], n_hidden, 1)
    wdm, bdm = lin(keys[3], n_hidden, n_drug)
    wds, bds = lin(keys[4], n_hidden, n_drug)
    return dict(
        w1=w1, b1=b1,
        bn_gamma=jnp.ones((1, n_hidden), jnp.float32),
        bn_beta=jnp.zeros((1, n_hidden), jnp.float32),
        bn_mean=jnp.zeros((1, n_hidden), jnp.float32),
        bn_var=jnp.ones((1, n_hidden), jnp.float32),
        wth=wth, bth=bth, wsc=wsc, bsc=bsc,
        wdm=wdm, bdm=bdm, wds=wds, bds=bds,
    )


if __name__ == "__main__":
    key = jax.random.PRNGKey(0)
    kp, kx, ks = jax.random.split(key, 3)

    B, n_input, n_hidden, n_drug = 8, 64, 32, 8
    params = init_params(kp, n_input, n_hidden, n_drug)
    prep = prepare_params(params)
    x = jax.random.normal(kx, (B, n_input), dtype=jnp.float32)

    fwd = jax.jit(encoder_forward, static_argnames=("n_drug",))
    z_cycle, z_drug = fwd(prep, x, ks, n_drug=n_drug)
    jax.block_until_ready((z_cycle, z_drug))

    assert z_cycle.shape == (B, 2)
    assert z_drug.shape == (B, n_drug)
    # power-spherical samples must lie on the unit circle
    norms = jnp.sqrt(jnp.sum(z_cycle * z_cycle, axis=1))
    assert bool(jnp.all(jnp.abs(norms - 1.0) < 1e-3))
    assert bool(jnp.all(jnp.isfinite(z_cycle))) and bool(jnp.all(jnp.isfinite(z_drug)))
    print("KERNEL_OK")
</pallas_src>

<mosaic_0001>
module attributes {stable_mosaic.version = 11 : i64} {
  func.func @_encoder_kernel(%arg0: i32, %arg1: i32, %arg2: memref<8x64xf32, #tpu.memory_space<vmem>>, %arg3: memref<64x128xbf16, #tpu.memory_space<vmem>>, %arg4: memref<1x128xf32, #tpu.memory_space<vmem>>, %arg5: memref<128x128xbf16, #tpu.memory_space<vmem>>, %arg6: memref<1x128xf32, #tpu.memory_space<vmem>>, %arg7: memref<8x128xf32, #tpu.memory_space<vmem>>, %arg8: memref<8x128xf32, #tpu.memory_space<vmem>>) attributes {dimension_semantics = [#tpu.dimension_semantics<parallel>, #tpu.dimension_semantics<arbitrary>], iteration_bounds = array<i64: 1, 1>, scalar_prefetch = 0 : i64, scratch_operands = 1 : i64, tpu.core_type = #tpu.core_type<tc>, window_params = [{transform_indices = @transform_0, window_bounds = array<i64: 8, 64>}, {transform_indices = @transform_1, window_bounds = array<i64: 64, 128>}, {pipeline_mode = #tpu.pipeline_mode<synchronous>, transform_indices = @transform_2, window_bounds = array<i64: 1, 128>}, {pipeline_mode = #tpu.pipeline_mode<synchronous>, transform_indices = @transform_3, window_bounds = array<i64: 128, 128>}, {pipeline_mode = #tpu.pipeline_mode<synchronous>, transform_indices = @transform_4, window_bounds = array<i64: 1, 128>}, {transform_indices = @transform_5, window_bounds = array<i64: 8, 128>}]} {
    %c0_i32 = arith.constant 0 : i32
    %0 = arith.cmpi eq, %arg1, %c0_i32 : i32
    %1 = arith.extui %0 : i1 to i32
    %c0_i32_0 = arith.constant 0 : i32
    %2 = arith.cmpi ne, %1, %c0_i32_0 : i32
    scf.if %2 {
      %cst_10 = arith.constant 0.000000e+00 : f32
      %13 = vector.broadcast %cst_10 : f32 to vector<8x128xf32>
      %c0_11 = arith.constant 0 : index
      %c0_12 = arith.constant 0 : index
      %14 = vector.load %arg8[%c0_11, %c0_12] : memref<8x128xf32, #tpu.memory_space<vmem>>, vector<8x128xf32>
      tpu.vector_store %arg8[%c0_11, %c0_12], %13 {strides = array<i32>} : memref<8x128xf32, #tpu.memory_space<vmem>>, vector<8x128xf32>,
    } else {
    }
    %c0 = arith.constant 0 : index
    %c0_1 = arith.constant 0 : index
    %3 = vector.load %arg8[%c0, %c0_1] : memref<8x128xf32, #tpu.memory_space<vmem>>, vector<8x128xf32>
    %c0_2 = arith.constant 0 : index
    %c0_3 = arith.constant 0 : index
    %4 = vector.load %arg2[%c0_2, %c0_3] : memref<8x64xf32, #tpu.memory_space<vmem>>, vector<8x64xf32>
    %5 = arith.truncf %4 : vector<8x64xf32> to vector<8x64xbf16>
    %c0_4 = arith.constant 0 : index
    %c0_5 = arith.constant 0 : index
    %6 = vector.load %arg3[%c0_4, %c0_5] : memref<64x128xbf16, #tpu.memory_space<vmem>>, vector<64x128xbf16>
    %cst = arith.constant dense<0.000000e+00> : vector<8x128xf32>
    %7 = tpu.matmul %5, %6, %cst {dimension_numbers = #tpu.dot_dimension_numbers<[1], [0], [0], [1], [0, 0, 1, 1], [], []>} : vector<8x64xbf16>, vector<64x128xbf16>, vector<8x128xf32> -> vector<8x128xf32>
    %8 = arith.addf %3, %7 : vector<8x128xf32>
    %c0_6 = arith.constant 0 : index
    %c0_7 = arith.constant 0 : index
    %9 = vector.load %arg8[%c0_6, %c0_7] : memref<8x128xf32, #tpu.memory_space<vmem>>, vector<8x128xf32>
    tpu.vector_store %arg8[%c0_6, %c0_7], %8 {strides = array<i32>} : memref<8x128xf32, #tpu.memory_space<vmem>>, vector<8x128xf32>,
    %c0_i32_8 = arith.constant 0 : i32
    %10 = arith.cmpi eq, %arg1, %c0_i32_8 : i32
    %11 = arith.extui %10 : i1 to i32
    %c0_i32_9 = arith.constant 0 : i32
    %12 = arith.cmpi ne, %11, %c0_i32_9 : i32
    scf.if %12 {
      %c0_10 = arith.constant 0 : index
      %c0_11 = arith.constant 0 : index
      %13 = vector.load %arg8[%c0_10, %c0_11] : memref<8x128xf32, #tpu.memory_space<vmem>>, vector<8x128xf32>
      %c0_12 = arith.constant 0 : index
      %c0_13 = arith.constant 0 : index
      %14 = vector.load %arg4[%c0_12, %c0_13] : memref<1x128xf32, #tpu.memory_space<vmem>>, vector<1x128xf32>
      %15 = vector.broadcast %14 : vector<1x128xf32> to vector<8x128xf32>
      %16 = arith.addf %13, %15 : vector<8x128xf32>
      %cst_14 = arith.constant 0.000000e+00 : f32
      %17 = vector.broadcast %cst_14 : f32 to vector<8x128xf32>
      %18 = arith.maximumf %16, %17 : vector<8x128xf32>
      %19 = arith.truncf %18 : vector<8x128xf32> to vector<8x128xbf16>
      %c0_15 = arith.constant 0 : index
      %c0_16 = arith.constant 0 : index
      %20 = vector.load %arg5[%c0_15, %c0_16] : memref<128x128xbf16, #tpu.memory_space<vmem>>, vector<128x128xbf16>
      %cst_17 = arith.constant dense<0.000000e+00> : vector<8x128xf32>
      %21 = tpu.matmul %19, %20, %cst_17 {dimension_numbers = #tpu.dot_dimension_numbers<[1], [0], [0], [1], [0, 0, 1, 1], [], []>} : vector<8x128xbf16>, vector<128x128xbf16>, vector<8x128xf32> -> vector<8x128xf32>
      %c0_18 = arith.constant 0 : index
      %c0_19 = arith.constant 0 : index
      %22 = vector.load %arg6[%c0_18, %c0_19] : memref<1x128xf32, #tpu.memory_space<vmem>>, vector<1x128xf32>
      %23 = vector.broadcast %22 : vector<1x128xf32> to vector<8x128xf32>
      %24 = arith.addf %21, %23 : vector<8x128xf32>
      %c0_20 = arith.constant 0 : index
      %c0_21 = arith.constant 0 : index
      %25 = vector.load %arg7[%c0_20, %c0_21] : memref<8x128xf32, #tpu.memory_space<vmem>>, vector<8x128xf32>
      tpu.vector_store %arg7[%c0_20, %c0_21], %24 {strides = array<i32>} : memref<8x128xf32, #tpu.memory_space<vmem>>, vector<8x128xf32>,
    } else {
    }
    return
  }
  func.func @transform_0(%arg0: i32, %arg1: i32) -> (i32, i32) {
    %c0_i32 = arith.constant 0 : i32
    return %arg0, %arg1 : i32, i32
  }
  func.func @transform_1(%arg0: i32, %arg1: i32) -> (i32, i32) {
    %c0_i32 = arith.constant 0 : i32
    %c0_i32_0 = arith.constant 0 : i32
    return %arg1, %c0_i32 : i32, i32
  }
  func.func @transform_2(%arg0: i32, %arg1: i32) -> (i32, i32) {
    %c0_i32 = arith.constant 0 : i32
    %c0_i32_0 = arith.constant 0 : i32
    %c0_i32_1 = arith.constant 0 : i32
    return %c0_i32, %c0_i32_0 : i32, i32
  }
  func.func @transform_3(%arg0: i32, %arg1: i32) -> (i32, i32) {
    %c0_i32 = arith.constant 0 : i32
    %c0_i32_0 = arith.constant 0 : i32
    %c0_i32_1 = arith.constant 0 : i32
    return %c0_i32, %c0_i32_0 : i32, i32
  }
  func.func @transform_4(%arg0: i32, %arg1: i32) -> (i32, i32) {
    %c0_i32 = arith.constant 0 : i32
    %c0_i32_0 = arith.constant 0 : i32
    %c0_i32_1 = arith.constant 0 : i32
    return %c0_i32, %c0_i32_0 : i32, i32
  }
  func.func @transform_5(%arg0: i32, %arg1: i32) -> (i32, i32) {
    %c0_i32 = arith.constant 0 : i32
    %c0_i32_0 = arith.constant 0 : i32
    return %arg0, %c0_i32 : i32, i32
  }
}

</mosaic_0001>

<llo_original>
// kernel: encoder_forward.5
$region0: #{encoder_forward.5}
  #allocation0 [shape = 'u32[]', space=smem, size = 0x4, offset = 0x4, fixed_abs, tag = 'smem constant byte address 0x4 - core index']
  #allocation1 [shape = 'u32[72,128]{1,0:T(1,128)}', space=vmem, size = 0x9000, scoped, tag = 'internal scratch']
  #allocation2 [shape = 'f32[8,128]{1,0:T(8,128)}', space=vmem, size = 0x1000, scoped, tag = 'scratch operand']
  %s0 = inlined_call_operand.hbm [shape: f32[8,64], index: 0, kind: input, shape index: {}]
  %s1 = inlined_call_operand.hbm [shape: bf16[64,128], index: 1, kind: input, shape index: {}]
  %s2 = inlined_call_operand.vmem [shape: f32[1,128], index: 2, kind: input, shape index: {}]
  %s3 = inlined_call_operand.hbm [shape: bf16[128,128], index: 3, kind: input, shape index: {}]
  %s4 = inlined_call_operand.hbm [shape: f32[1,128], index: 4, kind: input, shape index: {}]
  %s5 = inlined_call_operand.vmem [shape: f32[8,128], index: 5, kind: output, shape index: {}]
  %s6 = sld [smem:[#allocation0]]
  $region54: #{encoder_forward.5} parent=0
    _
  %s8 = ssub.s32 1, %s6
  %s9 = scalar_select 0, %s8, %s6
  $region1: #{encoder_forward.5} parent=0
    #allocation3 [shape = 'u8[4096]{0}', space=vmem, size = 0x1000, scoped, tag = 'input window, operand 0, single buffered']
    #allocation4 [shape = 's32[1]{0}', space=sflag, size = 0x4, scoped, tag = 'scoped memory for encoder_forward.5']
    #allocation5 [shape = 'u8[16384]{0}', space=vmem, size = 0x4000, scoped, tag = 'input window, operand 1, single buffered']
    #allocation6 [shape = 's32[1]{0}', space=sflag, size = 0x4, scoped, tag = 'scoped memory for encoder_forward.5']
    #allocation7 [shape = 'u8[32768]{0}', space=vmem, size = 0x8000, scoped, tag = 'input window, operand 3, single buffered']
    #allocation8 [shape = 'u8[512]{0}', space=vmem, size = 0x400, scoped, tag = 'input window, operand 4, single buffered']
    #allocation9 [shape = 's32[1]{0}', space=sflag, size = 0x4, scoped, tag = 'scoped memory for encoder_forward.5']
    %10 = vsyncpa [#allocation4], 0
    %11 = vsyncpa [#allocation6], 0
    %12 = vsyncpa [#allocation9], 0
    // Predicated region
    $region2: #{encoder_forward.5} parent=1 // pred_check
      _
    $region3: #{encoder_forward.5} parent=1 // pred_check_branch
      %14 = sbr.rel (0) target = $region5
    $region4: #{encoder_forward.5} parent=1 // pred_region
      %16 = vsyncadd [#allocation4], 0
      %s18 = sshll.u32 %s0, 4
      %s19 = int_to_ptr.hbm [resolvable:$true] %s18
      %s20 = sshll.u32 [#allocation3], 4
      %s21 = int_to_ptr.vmem [resolvable:$true] %s20
      %23 = dma.hbm_to_vmem [thread:$0]  %s19, 128, %s21, [#allocation4]
    $region5: #{encoder_forward.5} parent=1 // pred_fallthru
      _
    // Predicated region
    $region6: #{encoder_forward.5} parent=1 // pred_check
      _
    $region7: #{encoder_forward.5} parent=1 // pred_check_branch
      %25 = sbr.rel (0) target = $region9
    $region8: #{encoder_forward.5} parent=1 // pred_region
      %27 = vsyncadd [#allocation6], 0
      %s28 = sshll.u32 %s1, 4
      %s29 = int_to_ptr.hbm [resolvable:$true] %s28
      %s30 = sshll.u32 [#allocation5], 4
      %s31 = int_to_ptr.vmem [resolvable:$true] %s30
      %36 = dma.hbm_to_vmem [thread:$0]  %s29, 512, %s31, [#allocation6], 64, 64, 4
    $region9: #{encoder_forward.5} parent=1 // pred_fallthru
      _
    // Predicated region
    $region10: #{encoder_forward.5} parent=1 // pred_check
      _
    $region11: #{encoder_forward.5} parent=1 // pred_check_branch
      %38 = sbr.rel (0) target = $region13
    $region12: #{encoder_forward.5} parent=1 // pred_region
      _
    $region13: #{encoder_forward.5} parent=1 // pred_fallthru
      _
    // Predicated region
    $region14: #{encoder_forward.5} parent=1 // pred_check
      _
    $region15: #{encoder_forward.5} parent=1 // pred_check_branch
      %40 = sbr.rel (0) target = $region17
    $region16: #{encoder_forward.5} parent=1 // pred_region
      %42 = vsyncadd [#allocation6], 0
      %s43 = sshll.u32 %s3, 4
      %s44 = int_to_ptr.hbm [resolvable:$true] %s43
      %s45 = sshll.u32 [#allocation7], 4
      %s46 = int_to_ptr.vmem [resolvable:$true] %s45
      %51 = dma.hbm_to_vmem [thread:$0]  %s44, 1024, %s46, [#allocation6], 64, 64, 4
    $region17: #{encoder_forward.5} parent=1 // pred_fallthru
      _
    // Predicated region
    $region18: #{encoder_forward.5} parent=1 // pred_check
      _
    $region19: #{encoder_forward.5} parent=1 // pred_check_branch
      %53 = sbr.rel (0) target = $region21
    $region20: #{encoder_forward.5} parent=1 // pred_region
      %55 = vsyncadd [#allocation9], 0
      %s57 = sshll.u32 %s4, 4
      %s58 = int_to_ptr.hbm [resolvable:$true] %s57
      %s59 = sshll.u32 [#allocation8], 4
      %s60 = int_to_ptr.vmem [resolvable:$true] %s59
      %62 = dma.hbm_to_vmem [thread:$0]  %s58, 16, %s60, [#allocation9]
    $region21: #{encoder_forward.5} parent=1 // pred_fallthru
      _
    // Predicated region
    $region22: #{encoder_forward.5} parent=1 // pred_check
      _
    $region23: #{encoder_forward.5} parent=1 // pred_check_branch
      %64 = sbr.rel (0) target = $region25
    $region24: #{encoder_forward.5} parent=1 // pred_region
      %66 = dma.done [#allocation4], 128
    $region25: #{encoder_forward.5} parent=1 // pred_fallthru
      _
    // Predicated region
    $region26: #{encoder_forward.5} parent=1 // pred_check
      _
    $region27: #{encoder_forward.5} parent=1 // pred_check_branch
      %68 = sbr.rel (0) target = $region29
    $region28: #{encoder_forward.5} parent=1 // pred_region
      %70 = dma.done [#allocation6], 512
    $region29: #{encoder_forward.5} parent=1 // pred_fallthru
      _
    // Predicated region
    $region30: #{encoder_forward.5} parent=1 // pred_check
      _
    $region31: #{encoder_forward.5} parent=1 // pred_check_branch
      %72 = sbr.rel (0) target = $region33
    $region32: #{encoder_forward.5} parent=1 // pred_region
      %74 = dma.done [#allocation6], 1024
    $region33: #{encoder_forward.5} parent=1 // pred_fallthru
      _
    // Predicated region
    $region34: #{encoder_forward.5} parent=1 // pred_check
      _
    $region35: #{encoder_forward.5} parent=1 // pred_check_branch
      %76 = sbr.rel (0) target = $region37
    $region36: #{encoder_forward.5} parent=1 // pred_region
      %78 = dma.done [#allocation9], 16
    $region37: #{encoder_forward.5} parent=1 // pred_fallthru
      _
    %p80 = scmp.eq.s32.totalorder 0, 0
    // Predicated region
    $region38: #{encoder_forward.5} parent=1 // pred_check
      %p81 = pneg %p80
    $region39: #{encoder_forward.5} parent=1 // pred_check_branch
      %83 = sbr.rel (%p81) target = $region41
    $region40: #{encoder_forward.5} parent=1 // pred_region
      %84 = vst [vmem:[#allocation2] sm:$0xff] 0.0
    $region41: #{encoder_forward.5} parent=1 // pred_fallthru
      _
    %v85 = vld [vmem:[#allocation2] sm:$0xff]
    %v86 = vld [vmem:[#allocation3] sm:$0xff]
    %v87 = vpack.c.bf16 %v86, %v86
    %v88 = vld [vmem:[#allocation5] sm:$0xf]
    %v89 = vld [vmem:[#allocation5 + $0x4] sm:$0xf]
    %v90 = vld [vmem:[#allocation5 + $0x8] sm:$0xf]
    %v91 = vld [vmem:[#allocation5 + $0xc] sm:$0xf]
    %v92 = vld [vmem:[#allocation5 + $0x10] sm:$0xf]
    %v93 = vld [vmem:[#allocation5 + $0x14] sm:$0xf]
    %v94 = vld [vmem:[#allocation5 + $0x18] sm:$0xf]
    %v95 = vld [vmem:[#allocation5 + $0x1c] sm:$0xf]
    %v104 = vunpack.c.l.b16 %v88
    %v105 = vunpack.c.l.b16 %v89
    %v106 = vunpack.c.l.b16 %v90
    %v107 = vunpack.c.l.b16 %v91
    %v108 = vunpack.c.l.b16 %v92
    %v109 = vunpack.c.l.b16 %v93
    %v110 = vunpack.c.l.b16 %v94
    %v111 = vunpack.c.l.b16 %v95
    %v112 = vpack.c.b16 %v105, %v104
    %v113 = vpack.c.b16 %v107, %v106
    %v114 = vpack.c.b16 %v109, %v108
    %v115 = vpack.c.b16 %v111, %v110
    %vm120 = vcmask 523264
    %v122 = vsel %vm120, %v87, 0
    %124 = vmatpush.bf16.msra.mxu0 0
    %125 = vmatpush.bf16.msra.mxu0 0
    %126 = vmatpush.bf16.msra.mxu0 0
    %127 = vmatpush.bf16.msra.mxu0 0
    %128 = vmatpush.bf16.msra.mxu0 %v115
    %129 = vmatpush.bf16.msra.mxu0 %v114
    %130 = vmatpush.bf16.msra.mxu0 %v113
    %131 = vmatpush.bf16.msra.mxu0 %v112
    %132 = vmatmul.bf16.gmra.mxu0 %v122
    %v133 = vpop.f32.mrf.mxu0
    %v134 = vadd.f32 0.0, %v133
    %v135 = vpop.f32.mrf.mxu0
    %136 = vdwg.mxu0
    %v137 = vadd.f32 %v85, %v134
    %138 = vst [vmem:[#allocation2] sm:$0xff] %v137
    // Predicated region
    $region42: #{encoder_forward.5} parent=1 // pred_check
      %p139 = pneg %p80
    $region43: #{encoder_forward.5} parent=1 // pred_check_branch
      %141 = sbr.rel (%p139) target = $region45
    $region44: #{encoder_forward.5} parent=1 // pred_region
      %v142 = vld [vmem:[#allocation2] sm:$0xff]
      %v143 = vld [vmem:[%s2] sm:$0x1]
      %v145 = vperm.slane %v143, 0
      %v147 = vadd.f32 %v142, %v145
      %v148 = vmax.f32 %v147, 0.0
      %v149 = vpack.c.bf16 %v148, %v148
      %v150 = vld [vmem:[#allocation7] sm:$0xf]
      %v151 = vld [vmem:[#allocation7 + $0x4] sm:$0xf]
      %v152 = vld [vmem:[#allocation7 + $0x8] sm:$0xf]
      %v153 = vld [vmem:[#allocation7 + $0xc] sm:$0xf]
      %v154 = vld [vmem:[#allocation7 + $0x10] sm:$0xf]
      %v155 = vld [vmem:[#allocation7 + $0x14] sm:$0xf]
      %v156 = vld [vmem:[#allocation7 + $0x18] sm:$0xf]
      %v157 = vld [vmem:[#allocation7 + $0x1c] sm:$0xf]
      %v158 = vld [vmem:[#allocation7 + $0x20] sm:$0xf]
      %v159 = vld [vmem:[#allocation7 + $0x24] sm:$0xf]
      %v160 = vld [vmem:[#allocation7 + $0x28] sm:$0xf]
      %v161 = vld [vmem:[#allocation7 + $0x2c] sm:$0xf]
      %v162 = vld [vmem:[#allocation7 + $0x30] sm:$0xf]
      %v163 = vld [vmem:[#allocation7 + $0x34] sm:$0xf]
      %v164 = vld [vmem:[#allocation7 + $0x38] sm:$0xf]
      %v165 = vld [vmem:[#allocation7 + $0x3c] sm:$0xf]
      %v166 = vld [vmem:[#allocation8] sm:$0x1]
      %v168 = vperm.slane %v166, 0
      %v186 = vunpack.c.l.b16 %v150
      %v187 = vunpack.c.l.b16 %v151
      %v188 = vunpack.c.l.b16 %v152
      %v189 = vunpack.c.l.b16 %v153
      %v190 = vunpack.c.l.b16 %v154
      %v191 = vunpack.c.l.b16 %v155
      %v192 = vunpack.c.l.b16 %v156
      %v193 = vunpack.c.l.b16 %v157
      %v194 = vunpack.c.l.b16 %v158
      %v195 = vunpack.c.l.b16 %v159
      %v196 = vunpack.c.l.b16 %v160
      %v197 = vunpack.c.l.b16 %v161
      %v198 = vunpack.c.l.b16 %v162
      %v199 = vunpack.c.l.b16 %v163
      %v200 = vunpack.c.l.b16 %v164
      %v201 = vunpack.c.l.b16 %v165
      %v202 = vpack.c.b16 %v187, %v186
      %v203 = vpack.c.b16 %v189, %v188
      %v204 = vpack.c.b16 %v191, %v190
      %v205 = vpack.c.b16 %v193, %v192
      %v206 = vpack.c.b16 %v195, %v194
      %v207 = vpack.c.b16 %v197, %v196
      %v208 = vpack.c.b16 %v199, %v198
      %v209 = vpack.c.b16 %v201, %v200
      %218 = vmatpush.bf16.msra.mxu0 %v209
      %219 = vmatpush.bf16.msra.mxu0 %v208
      %220 = vmatpush.bf16.msra.mxu0 %v207
      %221 = vmatpush.bf16.msra.mxu0 %v206
      %222 = vmatpush.bf16.msra.mxu0 %v205
      %223 = vmatpush.bf16.msra.mxu0 %v204
      %224 = vmatpush.bf16.msra.mxu0 %v203
      %225 = vmatpush.bf16.msra.mxu0 %v202
      %226 = vmatmul.bf16.gmra.mxu0 %v149
      %v227 = vpop.f32.mrf.mxu0
      %v228 = vadd.f32 %v168, %v227
      %v229 = vpop.f32.mrf.mxu0
      %230 = vdwg.mxu0
      %231 = vst [vmem:[%s5] sm:$0xff] %v228
    $region45: #{encoder_forward.5} parent=1 // pred_fallthru
      _
    // Predicated region
    $region46: #{encoder_forward.5} parent=1 // pred_check
      _
    $region47: #{encoder_forward.5} parent=1 // pred_check_branch
      %233 = sbr.rel (0) target = $region49
    $region48: #{encoder_forward.5} parent=1 // pred_region
      _
    $region49: #{encoder_forward.5} parent=1 // pred_fallthru
      _
    // Predicated region
    $region50: #{encoder_forward.5} parent=1 // pred_check
      _
    $region51: #{encoder_forward.5} parent=1 // pred_check_branch
      %235 = sbr.rel (0) target = $region53
    $region52: #{encoder_forward.5} parent=1 // pred_region
      _
    $region53: #{encoder_forward.5} parent=1 // pred_fallthru
      _
    %236 = vsyncpa [#allocation4], 1
    %237 = vsyncpa [#allocation6], 1
    %238 = vsyncpa [#allocation9], 1

</llo_original>
